<compile_context>
chip_gen: v6e
topology: v6e:2x2x1
jax: 0.10.0
libtpu: 0.0.40
codegen_flags: <defaults>
</compile_context>

<pallas_src>
import math

import jax
import jax.numpy as jnp
from jax import lax
from jax.experimental import pallas as pl
from jax.experimental.pallas import tpu as pltpu


def _round_up(x, m):
    return ((x + m - 1) // m) * m


def _wn_linear_kernel(x_ref, w_ref, s_ref, b_ref, o_ref, acc_ref):
    # x_ref:  (tm, tk)   input rows tile
    # w_ref:  (tk, tn)   weight_v.T tile (un-normalized direction, native dtype)
    # s_ref:  (1, tn)    per-output-column scale = g / ||v_row||   (f32)
    # b_ref:  (1, tn)    bias (f32)
    # o_ref:  (tm, tn)   output tile
    # acc_ref:(tm, tn)   f32 accumulator scratch, persists across K steps
    k = pl.program_id(2)

    @pl.when(k == 0)
    def _():
        acc_ref[...] = jnp.zeros_like(acc_ref)

    acc_ref[...] += jnp.dot(x_ref[...], w_ref[...],
                            preferred_element_type=jnp.float32)

    @pl.when(k == pl.num_programs(2) - 1)
    def _():
        o_ref[...] = (acc_ref[...] * s_ref[...] + b_ref[...]).astype(o_ref.dtype)


def weight_norm_linear(x, weight_v, weight_g, bias=None, *,
                       tm=256, tn=256, tk=512):
    """Pallas forward for WeightNormLinear: F.linear(x, g*v/||v||, bias)."""
    *lead, K = x.shape
    N, Kv = weight_v.shape
    assert K == Kv
    x2 = x.reshape(-1, K)
    M = x2.shape[0]

    # One-time weight-norm scale, applied to the matmul OUTPUT inside the
    # kernel (w.T = v.T * diag(scale)); computed once here, not per grid step.
    v32 = weight_v.astype(jnp.float32)
    scale = weight_g.astype(jnp.float32).reshape(N) * lax.rsqrt(
        jnp.sum(v32 * v32, axis=1))
    if bias is None:
        b32 = jnp.zeros((N,), jnp.float32)
    else:
        b32 = bias.astype(jnp.float32).reshape(N)

    # Canonical MXU layout for the RHS: (K, N) with N on lanes. Native dtype
    # (no f32 upcast) -> bf16 inputs hit the fast MXU path; acc stays f32.
    wt = weight_v.T

    # Clamp tile sizes to the (padded) problem sizes; keep TPU-legal shapes.
    tm = min(tm, _round_up(M, 8))
    tn = min(tn, _round_up(N, 128))
    tk = min(tk, _round_up(K, 128))
    Mp, Np, Kp = _round_up(M, tm), _round_up(N, tn), _round_up(K, tk)

    # Zero padding: extra K contributes 0 to the dot; padded N columns get
    # scale=0 / bias=0 and are sliced off; padded M rows are sliced off.
    if Mp != M or Kp != K:
        x2 = jnp.pad(x2, ((0, Mp - M), (0, Kp - K)))
    if Kp != K or Np != N:
        wt = jnp.pad(wt, ((0, Kp - K), (0, Np - N)))
    if Np != N:
        scale = jnp.pad(scale, (0, Np - N))
        b32 = jnp.pad(b32, (0, Np - N))
    scale2 = scale.reshape(1, Np)
    b2 = b32.reshape(1, Np)

    grid = (Mp // tm, Np // tn, Kp // tk)

    out = pl.pallas_call(
        _wn_linear_kernel,
        out_shape=jax.ShapeDtypeStruct((Mp, Np), x.dtype),
        grid=grid,
        in_specs=[
            pl.BlockSpec((tm, tk), lambda i, j, k: (i, k)),   # x tile
            pl.BlockSpec((tk, tn), lambda i, j, k: (k, j)),   # v.T tile
            pl.BlockSpec((1, tn), lambda i, j, k: (0, j)),    # scale row
            pl.BlockSpec((1, tn), lambda i, j, k: (0, j)),    # bias row
        ],
        out_specs=pl.BlockSpec((tm, tn), lambda i, j, k: (i, j)),
        scratch_shapes=[pltpu.VMEM((tm, tn), jnp.float32)],
        compiler_params=pltpu.CompilerParams(
            dimension_semantics=("parallel", "parallel", "arbitrary"),
            vmem_limit_bytes=64 << 20,
        ),
    )(x2, wt, scale2, b2)

    out = out[:M, :N]
    return out.reshape(*lead, N)


def init_weight_norm_linear(key, in_features, out_features, *, bias=True,
                            fixed_g=False, dtype=jnp.float32):
    """Deterministic init mirroring WeightNormLinear.reset_parameters
    (init_weights='xavier_uniform')."""
    a = math.sqrt(6.0 / (in_features + out_features))
    weight_v = jax.random.uniform(
        key, (out_features, in_features), dtype=dtype, minval=-a, maxval=a)
    if fixed_g:
        weight_g = jnp.ones((out_features, 1), dtype=dtype)
    else:
        # torch.norm_except_dim(weight_v): per-row L2 norm, shape (out, 1)
        weight_g = jnp.sqrt(jnp.sum(weight_v.astype(jnp.float32) ** 2,
                                    axis=1, keepdims=True)).astype(dtype)
    b = jnp.zeros((out_features,), dtype=dtype) if bias else None
    return weight_v, weight_g, b


def _reference(x, weight_v, weight_g, bias):
    norm = jnp.sqrt(jnp.sum(weight_v.astype(jnp.float32) ** 2,
                            axis=1, keepdims=True))
    w = weight_v.astype(jnp.float32) * (weight_g.astype(jnp.float32).reshape(-1, 1) / norm)
    y = jnp.einsum("...k,nk->...n", x.astype(jnp.float32), w,
                   precision=lax.Precision.HIGHEST)
    if bias is not None:
        y = y + bias.astype(jnp.float32)
    return y


if __name__ == "__main__":
    key = jax.random.PRNGKey(0)
    k_x, k_w, k_b, k_x2, k_w2, k_b2 = jax.random.split(key, 6)

    ok = True

    # Case 1: small shapes (pads N 64->128, clamps tm to M=16).
    batch, seq = 2, 8
    in_features, out_features = 256, 64
    x = jax.random.normal(k_x, (batch, seq, in_features), dtype=jnp.float32)
    for fixed_g in (False, True):
        weight_v, weight_g, _ = init_weight_norm_linear(
            k_w, in_features, out_features, bias=True, fixed_g=fixed_g)
        bias = 0.1 * jax.random.normal(k_b, (out_features,), dtype=jnp.float32)
        y = jax.block_until_ready(weight_norm_linear(x, weight_v, weight_g, bias))
        y_ref = _reference(x, weight_v, weight_g, bias)
        if not jnp.allclose(y.astype(jnp.float32), y_ref, atol=1e-3, rtol=1e-3):
            ok = False

    # Case 2: exercises K-tiling/accumulator (K=640 -> 2 K-steps) and N padding.
    batch2, seq2 = 2, 128
    in2, out2 = 640, 160
    x2 = jax.random.normal(k_x2, (batch2, seq2, in2), dtype=jnp.float32)
    weight_v2, weight_g2, _ = init_weight_norm_linear(
        k_w2, in2, out2, bias=True, fixed_g=False)
    bias2 = 0.1 * jax.random.normal(k_b2, (out2,), dtype=jnp.float32)
    y2 = jax.block_until_ready(weight_norm_linear(x2, weight_v2, weight_g2, bias2))
    y2_ref = _reference(x2, weight_v2, weight_g2, bias2)
    if not jnp.allclose(y2.astype(jnp.float32), y2_ref, atol=1e-3, rtol=1e-3):
        ok = False

    if ok:
        print("KERNEL_OK")
</pallas_src>

<mosaic_0001>
module attributes {stable_mosaic.version = 11 : i64} {
  func.func @_wn_linear_kernel(%arg0: i32, %arg1: i32, %arg2: i32, %arg3: memref<16x256xf32, #tpu.memory_space<vmem>>, %arg4: memref<256x128xf32, #tpu.memory_space<vmem>>, %arg5: memref<1x128xf32, #tpu.memory_space<vmem>>, %arg6: memref<1x128xf32, #tpu.memory_space<vmem>>, %arg7: memref<16x128xf32, #tpu.memory_space<vmem>>, %arg8: memref<16x128xf32, #tpu.memory_space<vmem>>) attributes {dimension_semantics = [#tpu.dimension_semantics<parallel>, #tpu.dimension_semantics<parallel>, #tpu.dimension_semantics<arbitrary>], iteration_bounds = array<i64: 1, 1, 1>, scalar_prefetch = 0 : i64, scratch_operands = 1 : i64, tpu.core_type = #tpu.core_type<tc>, window_params = [{transform_indices = @transform_0, window_bounds = array<i64: 16, 256>}, {transform_indices = @transform_1, window_bounds = array<i64: 256, 128>}, {transform_indices = @transform_2, window_bounds = array<i64: 1, 128>}, {transform_indices = @transform_3, window_bounds = array<i64: 1, 128>}, {transform_indices = @transform_4, window_bounds = array<i64: 16, 128>}]} {
    %c0_i32 = arith.constant 0 : i32
    %0 = arith.cmpi eq, %arg2, %c0_i32 : i32
    %1 = arith.extui %0 : i1 to i32
    %c0_i32_0 = arith.constant 0 : i32
    %2 = arith.cmpi ne, %1, %c0_i32_0 : i32
    scf.if %2 {
      %cst_10 = arith.constant 0.000000e+00 : f32
      %12 = vector.broadcast %cst_10 : f32 to vector<16x128xf32>
      %c0_11 = arith.constant 0 : index
      %c0_12 = arith.constant 0 : index
      %13 = vector.load %arg8[%c0_11, %c0_12] : memref<16x128xf32, #tpu.memory_space<vmem>>, vector<16x128xf32>
      tpu.vector_store %arg8[%c0_11, %c0_12], %12 {strides = array<i32>} : memref<16x128xf32, #tpu.memory_space<vmem>>, vector<16x128xf32>,
    } else {
    }
    %c0 = arith.constant 0 : index
    %c0_1 = arith.constant 0 : index
    %3 = vector.load %arg8[%c0, %c0_1] : memref<16x128xf32, #tpu.memory_space<vmem>>, vector<16x128xf32>
    %c0_2 = arith.constant 0 : index
    %c0_3 = arith.constant 0 : index
    %4 = vector.load %arg3[%c0_2, %c0_3] : memref<16x256xf32, #tpu.memory_space<vmem>>, vector<16x256xf32>
    %c0_4 = arith.constant 0 : index
    %c0_5 = arith.constant 0 : index
    %5 = vector.load %arg4[%c0_4, %c0_5] : memref<256x128xf32, #tpu.memory_space<vmem>>, vector<256x128xf32>
    %cst = arith.constant dense<0.000000e+00> : vector<16x128xf32>
    %6 = tpu.matmul %4, %5, %cst {dimension_numbers = #tpu.dot_dimension_numbers<[1], [0], [0], [1], [0, 0, 1, 1], [], []>} : vector<16x256xf32>, vector<256x128xf32>, vector<16x128xf32> -> vector<16x128xf32>
    %7 = arith.addf %3, %6 : vector<16x128xf32>
    %c0_6 = arith.constant 0 : index
    %c0_7 = arith.constant 0 : index
    %8 = vector.load %arg8[%c0_6, %c0_7] : memref<16x128xf32, #tpu.memory_space<vmem>>, vector<16x128xf32>
    tpu.vector_store %arg8[%c0_6, %c0_7], %7 {strides = array<i32>} : memref<16x128xf32, #tpu.memory_space<vmem>>, vector<16x128xf32>,
    %c0_i32_8 = arith.constant 0 : i32
    %9 = arith.cmpi eq, %arg2, %c0_i32_8 : i32
    %10 = arith.extui %9 : i1 to i32
    %c0_i32_9 = arith.constant 0 : i32
    %11 = arith.cmpi ne, %10, %c0_i32_9 : i32
    scf.if %11 {
      %c0_10 = arith.constant 0 : index
      %c0_11 = arith.constant 0 : index
      %12 = vector.load %arg8[%c0_10, %c0_11] : memref<16x128xf32, #tpu.memory_space<vmem>>, vector<16x128xf32>
      %c0_12 = arith.constant 0 : index
      %c0_13 = arith.constant 0 : index
      %13 = vector.load %arg5[%c0_12, %c0_13] : memref<1x128xf32, #tpu.memory_space<vmem>>, vector<1x128xf32>
      %14 = vector.broadcast %13 : vector<1x128xf32> to vector<16x128xf32>
      %15 = arith.mulf %12, %14 : vector<16x128xf32>
      %c0_14 = arith.constant 0 : index
      %c0_15 = arith.constant 0 : index
      %16 = vector.load %arg6[%c0_14, %c0_15] : memref<1x128xf32, #tpu.memory_space<vmem>>, vector<1x128xf32>
      %17 = vector.broadcast %16 : vector<1x128xf32> to vector<16x128xf32>
      %18 = arith.addf %15, %17 : vector<16x128xf32>
      %c0_16 = arith.constant 0 : index
      %c0_17 = arith.constant 0 : index
      %19 = vector.load %arg7[%c0_16, %c0_17] : memref<16x128xf32, #tpu.memory_space<vmem>>, vector<16x128xf32>
      tpu.vector_store %arg7[%c0_16, %c0_17], %18 {strides = array<i32>} : memref<16x128xf32, #tpu.memory_space<vmem>>, vector<16x128xf32>,
    } else {
    }
    return
  }
  func.func @transform_0(%arg0: i32, %arg1: i32, %arg2: i32) -> (i32, i32) {
    %c0_i32 = arith.constant 0 : i32
    return %arg0, %arg2 : i32, i32
  }
  func.func @transform_1(%arg0: i32, %arg1: i32, %arg2: i32) -> (i32, i32) {
    %c0_i32 = arith.constant 0 : i32
    return %arg2, %arg1 : i32, i32
  }
  func.func @transform_2(%arg0: i32, %arg1: i32, %arg2: i32) -> (i32, i32) {
    %c0_i32 = arith.constant 0 : i32
    %c0_i32_0 = arith.constant 0 : i32
    return %c0_i32, %arg1 : i32, i32
  }
  func.func @transform_3(%arg0: i32, %arg1: i32, %arg2: i32) -> (i32, i32) {
    %c0_i32 = arith.constant 0 : i32
    %c0_i32_0 = arith.constant 0 : i32
    return %c0_i32, %arg1 : i32, i32
  }
  func.func @transform_4(%arg0: i32, %arg1: i32, %arg2: i32) -> (i32, i32) {
    %c0_i32 = arith.constant 0 : i32
    return %arg0, %arg1 : i32, i32
  }
}

</mosaic_0001>

<llo_original>
// kernel: tpu_custom_call.1
$region0: #{tpu_custom_call.1}
  #allocation0 [shape = 'u32[]', space=smem, size = 0x4, offset = 0x4, fixed_abs, tag = 'smem constant byte address 0x4 - core index']
  #allocation1 [shape = 'u32[144,128]{1,0:T(1,128)}', space=vmem, size = 0x12000, scoped, tag = 'internal scratch']
  #allocation2 [shape = 'f32[16,128]{1,0:T(8,128)}', space=vmem, size = 0x2000, scoped, tag = 'scratch operand']
  %s0 = inlined_call_operand.hbm [shape: f32[16,256], index: 0, kind: input, shape index: {}]
  %s1 = inlined_call_operand.hbm [shape: f32[256,128], index: 1, kind: input, shape index: {}]
  %s2 = inlined_call_operand.vmem [shape: f32[1,128], index: 2, kind: input, shape index: {}]
  %s3 = inlined_call_operand.vmem [shape: f32[1,128], index: 3, kind: input, shape index: {}]
  %s4 = inlined_call_operand.hbm [shape: f32[16,128], index: 4, kind: output, shape index: {}]
  %s5 = sld [smem:[#allocation0]]
  $region42: #{tpu_custom_call.1} parent=0
    _
  %s7 = ssub.s32 1, %s5
  %s8 = scalar_select 0, %s7, %s5
  $region1: #{tpu_custom_call.1} parent=0
    #allocation3 [shape = 'u8[16384]{0}', space=vmem, size = 0x4000, scoped, tag = 'input window, operand 0, single buffered']
    #allocation4 [shape = 's32[1]{0}', space=sflag, size = 0x4, scoped, tag = 'scoped memory for tpu_custom_call.1']
    #allocation5 [shape = 's32[1]{0}', space=sflag, size = 0x4, scoped, tag = 'scoped memory for tpu_custom_call.1']
    #allocation6 [shape = 'u8[131072]{0}', space=vmem, size = 0x20000, scoped, tag = 'input window, operand 1, single buffered']
    #allocation7 [shape = 's32[1]{0}', space=sflag, size = 0x4, scoped, tag = 'scoped memory for tpu_custom_call.1']
    #allocation8 [shape = 'u8[8192]{0}', space=vmem, size = 0x2000, scoped, tag = 'output window, operand 0, single buffered']
    %9 = vsyncpa [#allocation4], 0
    %10 = vsyncpa [#allocation7], 0
    %11 = vsyncpa [#allocation5], 0
    // Predicated region
    $region2: #{tpu_custom_call.1} parent=1 // pred_check
      _
    $region3: #{tpu_custom_call.1} parent=1 // pred_check_branch
      %13 = sbr.rel (0) target = $region5
    $region4: #{tpu_custom_call.1} parent=1 // pred_region
      %s15 = ssub.s32 512, 512
      %16 = vsyncadd [#allocation4], %s15
      %s17 = sshll.u32 [#allocation3], 4
      %s18 = int_to_ptr.vmem [resolvable:$true] %s17
      %23 = dma.hbm_to_vmem [thread:$0]  %s0, 512, %s18, [#allocation4], 256, 256, 16
    $region5: #{tpu_custom_call.1} parent=1 // pred_fallthru
      _
    // Predicated region
    $region6: #{tpu_custom_call.1} parent=1 // pred_check
      _
    $region7: #{tpu_custom_call.1} parent=1 // pred_check_branch
      %25 = sbr.rel (0) target = $region9
    $region8: #{tpu_custom_call.1} parent=1 // pred_region
      %s27 = ssub.s32 4096, 4096
      %28 = vsyncadd [#allocation7], %s27
      %s29 = sshll.u32 [#allocation6], 4
      %s30 = int_to_ptr.vmem [resolvable:$true] %s29
      %35 = dma.hbm_to_vmem [thread:$0]  %s1, 4096, %s30, [#allocation7], 128, 128, 8
    $region9: #{tpu_custom_call.1} parent=1 // pred_fallthru
      _
    // Predicated region
    $region10: #{tpu_custom_call.1} parent=1 // pred_check
      _
    $region11: #{tpu_custom_call.1} parent=1 // pred_check_branch
      %37 = sbr.rel (0) target = $region13
    $region12: #{tpu_custom_call.1} parent=1 // pred_region
      _
    $region13: #{tpu_custom_call.1} parent=1 // pred_fallthru
      _
    // Predicated region
    $region14: #{tpu_custom_call.1} parent=1 // pred_check
      _
    $region15: #{tpu_custom_call.1} parent=1 // pred_check_branch
      %39 = sbr.rel (0) target = $region17
    $region16: #{tpu_custom_call.1} parent=1 // pred_region
      _
    $region17: #{tpu_custom_call.1} parent=1 // pred_fallthru
      _
    // Predicated region
    $region18: #{tpu_custom_call.1} parent=1 // pred_check
      _
    $region19: #{tpu_custom_call.1} parent=1 // pred_check_branch
      %41 = sbr.rel (0) target = $region21
    $region20: #{tpu_custom_call.1} parent=1 // pred_region
      %42 = dma.done [#allocation4], 512
    $region21: #{tpu_custom_call.1} parent=1 // pred_fallthru
      _
    // Predicated region
    $region22: #{tpu_custom_call.1} parent=1 // pred_check
      _
    $region23: #{tpu_custom_call.1} parent=1 // pred_check_branch
      %44 = sbr.rel (0) target = $region25
    $region24: #{tpu_custom_call.1} parent=1 // pred_region
      %45 = dma.done [#allocation7], 4096
    $region25: #{tpu_custom_call.1} parent=1 // pred_fallthru
      _
    %p46 = scmp.eq.s32.totalorder 0, 0
    // Predicated region
    $region26: #{tpu_custom_call.1} parent=1 // pred_check
      %p47 = pneg %p46
    $region27: #{tpu_custom_call.1} parent=1 // pred_check_branch
      %49 = sbr.rel (%p47) target = $region29
    $region28: #{tpu_custom_call.1} parent=1 // pred_region
      %50 = vst [vmem:[#allocation2] sm:$0xff] 0.0
      %51 = vst [vmem:[#allocation2 + $0x8] sm:$0xff] 0.0
    $region29: #{tpu_custom_call.1} parent=1 // pred_fallthru
      _
    %v52 = vld [vmem:[#allocation2] sm:$0xff]
    %v53 = vld [vmem:[#allocation2 + $0x8] sm:$0xff]
    %v54 = vld [vmem:[#allocation3] sm:$0xff]
    %v55 = vld [vmem:[#allocation3 + $0x8] sm:$0xff]
    %v56 = vld [vmem:[#allocation3 + $0x10] sm:$0xff]
    %v57 = vld [vmem:[#allocation3 + $0x18] sm:$0xff]
    %v58 = vld [vmem:[#allocation6] sm:$0xff]
    %v59 = vld [vmem:[#allocation6 + $0x8] sm:$0xff]
    %v60 = vld [vmem:[#allocation6 + $0x10] sm:$0xff]
    %v61 = vld [vmem:[#allocation6 + $0x18] sm:$0xff]
    %v62 = vld [vmem:[#allocation6 + $0x20] sm:$0xff]
    %v63 = vld [vmem:[#allocation6 + $0x28] sm:$0xff]
    %v64 = vld [vmem:[#allocation6 + $0x30] sm:$0xff]
    %v65 = vld [vmem:[#allocation6 + $0x38] sm:$0xff]
    %v66 = vld [vmem:[#allocation6 + $0x40] sm:$0xff]
    %v67 = vld [vmem:[#allocation6 + $0x48] sm:$0xff]
    %v68 = vld [vmem:[#allocation6 + $0x50] sm:$0xff]
    %v69 = vld [vmem:[#allocation6 + $0x58] sm:$0xff]
    %v70 = vld [vmem:[#allocation6 + $0x60] sm:$0xff]
    %v71 = vld [vmem:[#allocation6 + $0x68] sm:$0xff]
    %v72 = vld [vmem:[#allocation6 + $0x70] sm:$0xff]
    %v73 = vld [vmem:[#allocation6 + $0x78] sm:$0xff]
    %v74 = vld [vmem:[#allocation6 + $0x80] sm:$0xff]
    %v75 = vld [vmem:[#allocation6 + $0x88] sm:$0xff]
    %v76 = vld [vmem:[#allocation6 + $0x90] sm:$0xff]
    %v77 = vld [vmem:[#allocation6 + $0x98] sm:$0xff]
    %v78 = vld [vmem:[#allocation6 + $0xa0] sm:$0xff]
    %v79 = vld [vmem:[#allocation6 + $0xa8] sm:$0xff]
    %v80 = vld [vmem:[#allocation6 + $0xb0] sm:$0xff]
    %v81 = vld [vmem:[#allocation6 + $0xb8] sm:$0xff]
    %v82 = vld [vmem:[#allocation6 + $0xc0] sm:$0xff]
    %v83 = vld [vmem:[#allocation6 + $0xc8] sm:$0xff]
    %v84 = vld [vmem:[#allocation6 + $0xd0] sm:$0xff]
    %v85 = vld [vmem:[#allocation6 + $0xd8] sm:$0xff]
    %v86 = vld [vmem:[#allocation6 + $0xe0] sm:$0xff]
    %v87 = vld [vmem:[#allocation6 + $0xe8] sm:$0xff]
    %v88 = vld [vmem:[#allocation6 + $0xf0] sm:$0xff]
    %v89 = vld [vmem:[#allocation6 + $0xf8] sm:$0xff]
    %90 = vmatprep.subr.mxu0 0.0
    %91 = vmatpush1.msra.mxu0 %v73
    %92 = vmatprep.subr.mxu0 0.0
    %93 = vmatpush1.msra.mxu0 %v72
    %94 = vmatprep.subr.mxu0 0.0
    %95 = vmatpush1.msra.mxu0 %v71
    %96 = vmatprep.subr.mxu0 0.0
    %97 = vmatpush1.msra.mxu0 %v70
    %98 = vmatprep.subr.mxu0 0.0
    %99 = vmatpush1.msra.mxu0 %v69
    %100 = vmatprep.subr.mxu0 0.0
    %101 = vmatpush1.msra.mxu0 %v68
    %102 = vmatprep.subr.mxu0 0.0
    %103 = vmatpush1.msra.mxu0 %v67
    %104 = vmatprep.subr.mxu0 0.0
    %105 = vmatpush1.msra.mxu0 %v66
    %106 = vmatprep.subr.mxu0 0.0
    %107 = vmatpush1.msra.mxu0 %v65
    %108 = vmatprep.subr.mxu0 0.0
    %109 = vmatpush1.msra.mxu0 %v64
    %110 = vmatprep.subr.mxu0 0.0
    %111 = vmatpush1.msra.mxu0 %v63
    %112 = vmatprep.subr.mxu0 0.0
    %113 = vmatpush1.msra.mxu0 %v62
    %114 = vmatprep.subr.mxu0 0.0
    %115 = vmatpush1.msra.mxu0 %v61
    %116 = vmatprep.subr.mxu0 0.0
    %117 = vmatpush1.msra.mxu0 %v60
    %118 = vmatprep.subr.mxu0 0.0
    %119 = vmatpush1.msra.mxu0 %v59
    %120 = vmatprep.subr.mxu0 0.0
    %121 = vmatpush1.msra.mxu0 %v58
    %122 = vmatprep.subr.mxu0 0.0
    %123 = vmatpush2.msra.mxu0 %v89
    %124 = vmatprep.subr.mxu0 0.0
    %125 = vmatpush2.msra.mxu0 %v88
    %126 = vmatprep.subr.mxu0 0.0
    %127 = vmatpush2.msra.mxu0 %v87
    %128 = vmatprep.subr.mxu0 0.0
    %129 = vmatpush2.msra.mxu0 %v86
    %130 = vmatprep.subr.mxu0 0.0
    %131 = vmatpush2.msra.mxu0 %v85
    %132 = vmatprep.subr.mxu0 0.0
    %133 = vmatpush2.msra.mxu0 %v84
    %134 = vmatprep.subr.mxu0 0.0
    %135 = vmatpush2.msra.mxu0 %v83
    %136 = vmatprep.subr.mxu0 0.0
    %137 = vmatpush2.msra.mxu0 %v82
    %138 = vmatprep.subr.mxu0 0.0
    %139 = vmatpush2.msra.mxu0 %v81
    %140 = vmatprep.subr.mxu0 0.0
    %141 = vmatpush2.msra.mxu0 %v80
    %142 = vmatprep.subr.mxu0 0.0
    %143 = vmatpush2.msra.mxu0 %v79
    %144 = vmatprep.subr.mxu0 0.0
    %145 = vmatpush2.msra.mxu0 %v78
    %146 = vmatprep.subr.mxu0 0.0
    %147 = vmatpush2.msra.mxu0 %v77
    %148 = vmatprep.subr.mxu0 0.0
    %149 = vmatpush2.msra.mxu0 %v76
    %150 = vmatprep.subr.mxu0 0.0
    %151 = vmatpush2.msra.mxu0 %v75
    %152 = vmatprep.subr.mxu0 0.0
    %153 = vmatpush2.msra.mxu0 %v74
    %154 = vmatprep.mubr.f32.mxu0 %v55
    %155 = vmatmul.mubr.f32.gmra.mxu0 %v54
    %v156 = vpop.f32.mrf.mxu0
    %v157 = vadd.f32 0.0, %v156
    %v158 = vpop.f32.mrf.mxu0
    %159 = vmatprep.mubr.f32.mxu0 %v57
    %160 = vmatmul.mubr.f32.gmra.mxu0 %v56
    %v161 = vpop.f32.mrf.mxu0
    %v162 = vadd.f32 0.0, %v161
    %v163 = vpop.f32.mrf.mxu0
    %164 = vdwg.mxu0
    %v165 = vadd.f32 %v52, %v157
    %v166 = vadd.f32 %v53, %v162
    %167 = vst [vmem:[#allocation2] sm:$0xff] %v165
    %168 = vst [vmem:[#allocation2 + $0x8] sm:$0xff] %v166
    // Predicated region
    $region30: #{tpu_custom_call.1} parent=1 // pred_check
      %p169 = pneg %p46
    $region31: #{tpu_custom_call.1} parent=1 // pred_check_branch
      %171 = sbr.rel (%p169) target = $region33
    $region32: #{tpu_custom_call.1} parent=1 // pred_region
      %v172 = vld [vmem:[#allocation2] sm:$0xff]
      %v173 = vld [vmem:[#allocation2 + $0x8] sm:$0xff]
      %v174 = vld [vmem:[%s2] sm:$0x1]
      %v176 = vlaneseq
      %v177 = vshrl.u32 %v176, 7
      %v178 = vsub.s32 0, %v177
      %v179 = vrot.slane %v174, %v178
      %v181 = vmul.f32 %v172, %v179
      %v182 = vmul.f32 %v173, %v179
      %v183 = vld [vmem:[%s3] sm:$0x1]
      %v185 = vlaneseq
      %v186 = vshrl.u32 %v185, 7
      %v187 = vsub.s32 0, %v186
      %v188 = vrot.slane %v183, %v187
      %v190 = vadd.f32 %v181, %v188
      %v191 = vadd.f32 %v182, %v188
      %192 = vst [vmem:[#allocation8] sm:$0xff] %v190
      %193 = vst [vmem:[#allocation8 + $0x8] sm:$0xff] %v191
    $region33: #{tpu_custom_call.1} parent=1 // pred_fallthru
      _
    // Predicated region
    $region34: #{tpu_custom_call.1} parent=1 // pred_check
      _
    $region35: #{tpu_custom_call.1} parent=1 // pred_check_branch
      %195 = sbr.rel (0) target = $region37
    $region36: #{tpu_custom_call.1} parent=1 // pred_region
      %s197 = ssub.s32 256, 256
      %198 = vsyncadd [#allocation5], %s197
      %s199 = sshll.u32 [#allocation8], 4
      %s200 = int_to_ptr.vmem [resolvable:$true] %s199
      %205 = dma.vmem_to_hbm [thread:$0]  %s200, 256, %s4, [#allocation5], 128, 128, 8
    $region37: #{tpu_custom_call.1} parent=1 // pred_fallthru
      _
    // Predicated region
    $region38: #{tpu_custom_call.1} parent=1 // pred_check
      _
    $region39: #{tpu_custom_call.1} parent=1 // pred_check_branch
      %207 = sbr.rel (0) target = $region41
    $region40: #{tpu_custom_call.1} parent=1 // pred_region
      %208 = dma.done [#allocation5], 256
    $region41: #{tpu_custom_call.1} parent=1 // pred_fallthru
      _
    %209 = vsyncpa [#allocation4], 1
    %210 = vsyncpa [#allocation7], 1
    %211 = vsyncpa [#allocation5], 1

</llo_original>
